<compile_context>
chip_gen: v7x
topology: tpu7x:2x2x1
jax: 0.10.0
libtpu: 0.0.40
codegen_flags: <defaults>
</compile_context>

<pallas_src>
import functools

import jax
import jax.numpy as jnp
from jax import lax
from jax.experimental import pallas as pl
from jax.experimental.pallas import tpu as pltpu


_N_DOWN = {2: 1, 4: 2, 8: 3}     # number of (Conv1d k=4 s=2 p=1, LeakyReLU) blocks


# ---------------------------------------------------------------------------
# Fused encoder kernel: one batch element per grid step, all layers in VMEM.
# ---------------------------------------------------------------------------
def _make_encoder_kernel(T, n_down, neg_slope):
    n_layers = n_down + 1

    def kernel(*refs):
        x_ref = refs[0]
        w_refs = refs[1:1 + n_layers]                     # packed (K*Cin, Cout)
        b_refs = refs[1 + n_layers:1 + 2 * n_layers]      # (1, Cout)
        o_ref = refs[1 + 2 * n_layers]                    # (L_out, Cout)
        scr = refs[2 + 2 * n_layers:]                     # halo-padded activations

        def tap(src_ref, k, L_out, stride):
            if stride == 1:
                return src_ref[pl.ds(k, L_out), :]
            return src_ref[pl.ds(k, L_out, stride=stride), :]

        def conv(src_ref, L_out, K, stride, w_ref, b_ref, relu):
            cout = w_ref.shape[1]
            cin = w_ref.shape[0] // K
            if K * cin <= 8:
                # Tiny contraction (e.g. in_channel=1): VPU broadcast-MACs;
                # an MXU matmul would be >95% idle on a 4-deep contraction.
                acc = jnp.zeros((L_out, cout), jnp.float32) + b_ref[...]
                for k in range(K):
                    xs = tap(src_ref, k, L_out, stride)            # (L_out, cin)
                    for c in range(cin):
                        acc = acc + xs[:, c:c + 1] * w_ref[pl.ds(k * cin + c, 1), :]
            else:
                # im2col: K shifted (strided) slices concatenated on the lane
                # axis -> ONE MXU matmul with a K*Cin-deep contraction.
                cols = jnp.concatenate(
                    [tap(src_ref, k, L_out, stride) for k in range(K)], axis=1)
                acc = jnp.dot(cols, w_ref[...],
                              preferred_element_type=jnp.float32) + b_ref[...]
            if relu:
                acc = jnp.where(acc >= 0, acc, neg_slope * acc)
            return acc

        # Stage the input with a 1-row zero halo on each side (pad=1) in VMEM.
        s = scr[0]
        s[...] = jnp.zeros_like(s)
        s[pl.ds(1, T), :] = x_ref[...]

        L = T
        for i in range(n_down):       # Conv1d(k=4, s=2, p=1) + LeakyReLU(0.2)
            L_out = L // 2
            h = conv(s, L_out, 4, 2, w_refs[i], b_refs[i], relu=True)
            s = scr[i + 1]
            s[...] = jnp.zeros_like(s)
            s[pl.ds(1, L_out), :] = h
            L = L_out

        # Final Conv1d(k=3, s=1, p=1), no activation.
        y = conv(s, L, 3, 1, w_refs[n_down], b_refs[n_down], relu=False)
        o_ref[...] = y.astype(o_ref.dtype)

    return kernel


def encoder_forward(x, params, *, stride=8, neg_slope=0.2):
    """Fused Encoder forward.

    x: (B, in_channel, T) float32 (PyTorch NCL layout).
    params: {"w": [packed (K*Cin, Cout)...], "b": [(1, Cout)...]} from prepare_params.
    returns: (B, out_channel, T // stride) float32.
    """
    n_down = _N_DOWN[stride]
    ws, bs = params["w"], params["b"]
    assert len(ws) == n_down + 1 and len(bs) == n_down + 1
    B, Cin, T = x.shape
    assert T % stride == 0, "sequence length must be divisible by the stride"
    L_final = T // stride
    Cout = ws[-1].shape[1]

    x_cl = jnp.transpose(x, (0, 2, 1))                      # (B, T, Cin)

    scratch = [pltpu.VMEM((T + 2, Cin), jnp.float32)]
    L = T
    for i in range(n_down):
        L //= 2
        scratch.append(pltpu.VMEM((L + 2, ws[i].shape[1]), jnp.float32))

    in_specs = [pl.BlockSpec((None, T, Cin), lambda b: (b, 0, 0))]
    in_specs += [pl.BlockSpec(w.shape, lambda b: (0, 0)) for w in ws]
    in_specs += [pl.BlockSpec(bb.shape, lambda b: (0, 0)) for bb in bs]

    out_cl = pl.pallas_call(
        _make_encoder_kernel(T, n_down, neg_slope),
        out_shape=jax.ShapeDtypeStruct((B, L_final, Cout), jnp.float32),
        grid=(B,),
        in_specs=in_specs,
        out_specs=pl.BlockSpec((None, L_final, Cout), lambda b: (b, 0, 0)),
        scratch_shapes=scratch,
        compiler_params=pltpu.CompilerParams(dimension_semantics=("parallel",)),
    )(x_cl, *ws, *bs)

    return jnp.transpose(out_cl, (0, 2, 1))                 # (B, Cout, T//stride)


# ---------------------------------------------------------------------------
# Parameters: PyTorch Conv1d layout + one-time repacking for the kernel.
# ---------------------------------------------------------------------------
def init_torch_params(key, in_channel=1, channel=32, out_channel=64, stride=8):
    """Conv weights/biases in PyTorch Conv1d layout: w (Cout, Cin, K), b (Cout,)."""
    n_down = _N_DOWN[stride]
    layers, cin = [], in_channel
    for _ in range(n_down):
        layers.append((channel, cin, 4))
        cin = channel
    layers.append((out_channel, cin, 3))
    ks = jax.random.split(key, 2 * len(layers))
    params = []
    for i, (co, ci, k) in enumerate(layers):
        w = 0.1 * jax.random.normal(ks[2 * i], (co, ci, k), jnp.float32)
        b = 0.1 * jax.random.normal(ks[2 * i + 1], (co,), jnp.float32)
        params.append((w, b))
    return params


def prepare_params(torch_params):
    """One-time repack: (Cout, Cin, K) -> (K*Cin, Cout) so the in-kernel im2col
    needs a single matmul; bias -> (1, Cout).  Row index = k*Cin + c."""
    ws, bs = [], []
    for w, b in torch_params:
        co, ci, k = w.shape
        ws.append(jnp.transpose(w, (2, 1, 0)).reshape(k * ci, co))
        bs.append(b.reshape(1, co))
    return {"w": ws, "b": bs}


# ---------------------------------------------------------------------------
# Pure-JAX reference (mirrors the PyTorch Encoder) for a correctness check.
# ---------------------------------------------------------------------------
def reference_forward(x, torch_params, *, stride=8, neg_slope=0.2):
    n_down = _N_DOWN[stride]
    h = x
    for i, (w, b) in enumerate(torch_params):
        s = 2 if i < n_down else 1
        h = lax.conv_general_dilated(
            h, w, (s,), [(1, 1)],
            dimension_numbers=("NCH", "OIH", "NCH"),
            precision=lax.Precision.HIGHEST) + b[None, :, None]
        if i < n_down:
            h = jnp.where(h >= 0, h, neg_slope * h)
    return h


if __name__ == "__main__":
    key = jax.random.PRNGKey(0)
    in_channel, channel, out_channel, stride = 1, 32, 64, 8
    B, T = 2, 64                                    # T divisible by stride

    tparams = init_torch_params(key, in_channel, channel, out_channel, stride)
    kparams = prepare_params(tparams)
    x = jax.random.normal(jax.random.fold_in(key, 123), (B, in_channel, T),
                          jnp.float32)

    fwd = jax.jit(functools.partial(encoder_forward, stride=stride))
    out = jax.block_until_ready(fwd(x, kparams))

    assert out.shape == (B, out_channel, T // stride) and out.dtype == jnp.float32

    ref = reference_forward(x, tparams, stride=stride)
    err = float(jnp.max(jnp.abs(out - ref)))
    assert jnp.allclose(out, ref, atol=5e-3, rtol=5e-3), err
    print("KERNEL_OK")
</pallas_src>

<mosaic_0001>
module attributes {stable_mosaic.version = 11 : i64} {
  func.func @kernel(%arg0: i32, %arg1: memref<1x64x1xf32, #tpu.memory_space<vmem>>, %arg2: memref<4x32xf32, #tpu.memory_space<vmem>>, %arg3: memref<128x32xf32, #tpu.memory_space<vmem>>, %arg4: memref<128x32xf32, #tpu.memory_space<vmem>>, %arg5: memref<96x64xf32, #tpu.memory_space<vmem>>, %arg6: memref<1x32xf32, #tpu.memory_space<vmem>>, %arg7: memref<1x32xf32, #tpu.memory_space<vmem>>, %arg8: memref<1x32xf32, #tpu.memory_space<vmem>>, %arg9: memref<1x64xf32, #tpu.memory_space<vmem>>, %arg10: memref<1x8x64xf32, #tpu.memory_space<vmem>>, %arg11: memref<66x1xf32, #tpu.memory_space<vmem>>, %arg12: memref<34x32xf32, #tpu.memory_space<vmem>>, %arg13: memref<18x32xf32, #tpu.memory_space<vmem>>, %arg14: memref<10x32xf32, #tpu.memory_space<vmem>>) attributes {dimension_semantics = [#tpu.dimension_semantics<parallel>], iteration_bounds = array<i64: 2>, scalar_prefetch = 0 : i64, scratch_operands = 4 : i64, tpu.core_type = #tpu.core_type<tc>, window_params = [{transform_indices = @transform_0, window_bounds = array<i64: 1, 64, 1>}, {pipeline_mode = #tpu.pipeline_mode<synchronous>, transform_indices = @transform_1, window_bounds = array<i64: 4, 32>}, {pipeline_mode = #tpu.pipeline_mode<synchronous>, transform_indices = @transform_2, window_bounds = array<i64: 128, 32>}, {pipeline_mode = #tpu.pipeline_mode<synchronous>, transform_indices = @transform_3, window_bounds = array<i64: 128, 32>}, {pipeline_mode = #tpu.pipeline_mode<synchronous>, transform_indices = @transform_4, window_bounds = array<i64: 96, 64>}, {pipeline_mode = #tpu.pipeline_mode<synchronous>, transform_indices = @transform_5, window_bounds = array<i64: 1, 32>}, {pipeline_mode = #tpu.pipeline_mode<synchronous>, transform_indices = @transform_6, window_bounds = array<i64: 1, 32>}, {pipeline_mode = #tpu.pipeline_mode<synchronous>, transform_indices = @transform_7, window_bounds = array<i64: 1, 32>}, {pipeline_mode = #tpu.pipeline_mode<synchronous>, transform_indices = @transform_8, window_bounds = array<i64: 1, 64>}, {transform_indices = @transform_9, window_bounds = array<i64: 1, 8, 64>}]} {
    %cst = arith.constant 0.000000e+00 : f32
    %0 = vector.broadcast %cst : f32 to vector<66x1xf32>
    %c0 = arith.constant 0 : index
    %c0_0 = arith.constant 0 : index
    %1 = vector.load %arg11[%c0, %c0_0] : memref<66x1xf32, #tpu.memory_space<vmem>>, vector<66x1xf32>
    tpu.vector_store %arg11[%c0, %c0_0], %0 {strides = array<i32>} : memref<66x1xf32, #tpu.memory_space<vmem>>, vector<66x1xf32>,
    %c0_1 = arith.constant 0 : index
    %c0_2 = arith.constant 0 : index
    %c0_3 = arith.constant 0 : index
    %2 = vector.load %arg1[%c0_1, %c0_2, %c0_3] : memref<1x64x1xf32, #tpu.memory_space<vmem>>, vector<1x64x1xf32>
    %3 = vector.shape_cast %2 : vector<1x64x1xf32> to vector<64x1xf32>
    %c1 = arith.constant 1 : index
    %c0_4 = arith.constant 0 : index
    %4 = vector.load %arg11[%c1, %c0_4] : memref<66x1xf32, #tpu.memory_space<vmem>>, vector<64x1xf32>
    tpu.vector_store %arg11[%c1, %c0_4], %3 {strides = array<i32>} : memref<66x1xf32, #tpu.memory_space<vmem>>, vector<64x1xf32>,
    %cst_5 = arith.constant 0.000000e+00 : f32
    %5 = vector.broadcast %cst_5 : f32 to vector<32x32xf32>
    %c0_6 = arith.constant 0 : index
    %c0_7 = arith.constant 0 : index
    %6 = vector.load %arg6[%c0_6, %c0_7] : memref<1x32xf32, #tpu.memory_space<vmem>>, vector<1x32xf32>
    %7 = vector.broadcast %6 : vector<1x32xf32> to vector<32x32xf32>
    %8 = arith.addf %5, %7 : vector<32x32xf32>
    %c0_8 = arith.constant 0 : index
    %c0_9 = arith.constant 0 : index
    %9 = tpu.strided_load %arg11[%c0_8, %c0_9] {strides = array<i32: 2, 1>} : memref<66x1xf32, #tpu.memory_space<vmem>>, vector<32x1xf32>
    %c0_10 = arith.constant 0 : index
    %c0_11 = arith.constant 0 : index
    %10 = vector.load %arg2[%c0_10, %c0_11] : memref<4x32xf32, #tpu.memory_space<vmem>>, vector<1x32xf32>
    %11 = vector.broadcast %9 : vector<32x1xf32> to vector<32x32xf32>
    %12 = vector.broadcast %10 : vector<1x32xf32> to vector<32x32xf32>
    %13 = arith.mulf %11, %12 : vector<32x32xf32>
    %14 = arith.addf %8, %13 : vector<32x32xf32>
    %c1_12 = arith.constant 1 : index
    %c0_13 = arith.constant 0 : index
    %15 = tpu.strided_load %arg11[%c1_12, %c0_13] {strides = array<i32: 2, 1>} : memref<66x1xf32, #tpu.memory_space<vmem>>, vector<32x1xf32>
    %c1_14 = arith.constant 1 : index
    %c0_15 = arith.constant 0 : index
    %16 = vector.load %arg2[%c1_14, %c0_15] : memref<4x32xf32, #tpu.memory_space<vmem>>, vector<1x32xf32>
    %17 = vector.broadcast %15 : vector<32x1xf32> to vector<32x32xf32>
    %18 = vector.broadcast %16 : vector<1x32xf32> to vector<32x32xf32>
    %19 = arith.mulf %17, %18 : vector<32x32xf32>
    %20 = arith.addf %14, %19 : vector<32x32xf32>
    %c2 = arith.constant 2 : index
    %c0_16 = arith.constant 0 : index
    %21 = tpu.strided_load %arg11[%c2, %c0_16] {strides = array<i32: 2, 1>} : memref<66x1xf32, #tpu.memory_space<vmem>>, vector<32x1xf32>
    %c2_17 = arith.constant 2 : index
    %c0_18 = arith.constant 0 : index
    %22 = vector.load %arg2[%c2_17, %c0_18] : memref<4x32xf32, #tpu.memory_space<vmem>>, vector<1x32xf32>
    %23 = vector.broadcast %21 : vector<32x1xf32> to vector<32x32xf32>
    %24 = vector.broadcast %22 : vector<1x32xf32> to vector<32x32xf32>
    %25 = arith.mulf %23, %24 : vector<32x32xf32>
    %26 = arith.addf %20, %25 : vector<32x32xf32>
    %c3 = arith.constant 3 : index
    %c0_19 = arith.constant 0 : index
    %27 = tpu.strided_load %arg11[%c3, %c0_19] {strides = array<i32: 2, 1>} : memref<66x1xf32, #tpu.memory_space<vmem>>, vector<32x1xf32>
    %c3_20 = arith.constant 3 : index
    %c0_21 = arith.constant 0 : index
    %28 = vector.load %arg2[%c3_20, %c0_21] : memref<4x32xf32, #tpu.memory_space<vmem>>, vector<1x32xf32>
    %29 = vector.broadcast %27 : vector<32x1xf32> to vector<32x32xf32>
    %30 = vector.broadcast %28 : vector<1x32xf32> to vector<32x32xf32>
    %31 = arith.mulf %29, %30 : vector<32x32xf32>
    %32 = arith.addf %26, %31 : vector<32x32xf32>
    %cst_22 = arith.constant 0.000000e+00 : f32
    %33 = vector.broadcast %cst_22 : f32 to vector<32x32xf32>
    %34 = arith.cmpf oge, %32, %33 : vector<32x32xf32>
    %cst_23 = arith.constant 2.000000e-01 : f32
    %35 = vector.broadcast %cst_23 : f32 to vector<32x32xf32>
    %36 = arith.mulf %35, %32 : vector<32x32xf32>
    %37 = arith.select %34, %32, %36 : vector<32x32xi1>, vector<32x32xf32>
    %cst_24 = arith.constant 0.000000e+00 : f32
    %38 = vector.broadcast %cst_24 : f32 to vector<34x32xf32>
    %c0_25 = arith.constant 0 : index
    %c0_26 = arith.constant 0 : index
    %39 = vector.load %arg12[%c0_25, %c0_26] : memref<34x32xf32, #tpu.memory_space<vmem>>, vector<34x32xf32>
    tpu.vector_store %arg12[%c0_25, %c0_26], %38 {strides = array<i32>} : memref<34x32xf32, #tpu.memory_space<vmem>>, vector<34x32xf32>,
    %c1_27 = arith.constant 1 : index
    %c0_28 = arith.constant 0 : index
    %40 = vector.load %arg12[%c1_27, %c0_28] : memref<34x32xf32, #tpu.memory_space<vmem>>, vector<32x32xf32>
    tpu.vector_store %arg12[%c1_27, %c0_28], %37 {strides = array<i32>} : memref<34x32xf32, #tpu.memory_space<vmem>>, vector<32x32xf32>,
    %c0_29 = arith.constant 0 : index
    %c0_30 = arith.constant 0 : index
    %41 = tpu.strided_load %arg12[%c0_29, %c0_30] {strides = array<i32: 2, 1>} : memref<34x32xf32, #tpu.memory_space<vmem>>, vector<16x32xf32>
    %c1_31 = arith.constant 1 : index
    %c0_32 = arith.constant 0 : index
    %42 = tpu.strided_load %arg12[%c1_31, %c0_32] {strides = array<i32: 2, 1>} : memref<34x32xf32, #tpu.memory_space<vmem>>, vector<16x32xf32>
    %c2_33 = arith.constant 2 : index
    %c0_34 = arith.constant 0 : index
    %43 = tpu.strided_load %arg12[%c2_33, %c0_34] {strides = array<i32: 2, 1>} : memref<34x32xf32, #tpu.memory_space<vmem>>, vector<16x32xf32>
    %c3_35 = arith.constant 3 : index
    %c0_36 = arith.constant 0 : index
    %44 = tpu.strided_load %arg12[%c3_35, %c0_36] {strides = array<i32: 2, 1>} : memref<34x32xf32, #tpu.memory_space<vmem>>, vector<16x32xf32>
    %45 = tpu.concatenate %41, %42, %43, %44 in 1 : vector<16x32xf32>, vector<16x32xf32>, vector<16x32xf32>, vector<16x32xf32> -> vector<16x128xf32>
    %c0_37 = arith.constant 0 : index
    %c0_38 = arith.constant 0 : index
    %46 = vector.load %arg3[%c0_37, %c0_38] : memref<128x32xf32, #tpu.memory_space<vmem>>, vector<128x32xf32>
    %cst_39 = arith.constant dense<0.000000e+00> : vector<16x32xf32>
    %47 = tpu.matmul %45, %46, %cst_39 {dimension_numbers = #tpu.dot_dimension_numbers<[1], [0], [0], [1], [0, 0, 1, 1], [], []>} : vector<16x128xf32>, vector<128x32xf32>, vector<16x32xf32> -> vector<16x32xf32>
    %c0_40 = arith.constant 0 : index
    %c0_41 = arith.constant 0 : index
    %48 = vector.load %arg7[%c0_40, %c0_41] : memref<1x32xf32, #tpu.memory_space<vmem>>, vector<1x32xf32>
    %49 = vector.broadcast %48 : vector<1x32xf32> to vector<16x32xf32>
    %50 = arith.addf %47, %49 : vector<16x32xf32>
    %cst_42 = arith.constant 0.000000e+00 : f32
    %51 = vector.broadcast %cst_42 : f32 to vector<16x32xf32>
    %52 = arith.cmpf oge, %50, %51 : vector<16x32xf32>
    %cst_43 = arith.constant 2.000000e-01 : f32
    %53 = vector.broadcast %cst_43 : f32 to vector<16x32xf32>
    %54 = arith.mulf %53, %50 : vector<16x32xf32>
    %55 = arith.select %52, %50, %54 : vector<16x32xi1>, vector<16x32xf32>
    %cst_44 = arith.constant 0.000000e+00 : f32
    %56 = vector.broadcast %cst_44 : f32 to vector<18x32xf32>
    %c0_45 = arith.constant 0 : index
    %c0_46 = arith.constant 0 : index
    %57 = vector.load %arg13[%c0_45, %c0_46] : memref<18x32xf32, #tpu.memory_space<vmem>>, vector<18x32xf32>
    tpu.vector_store %arg13[%c0_45, %c0_46], %56 {strides = array<i32>} : memref<18x32xf32, #tpu.memory_space<vmem>>, vector<18x32xf32>,
    %c1_47 = arith.constant 1 : index
    %c0_48 = arith.constant 0 : index
    %58 = vector.load %arg13[%c1_47, %c0_48] : memref<18x32xf32, #tpu.memory_space<vmem>>, vector<16x32xf32>
    tpu.vector_store %arg13[%c1_47, %c0_48], %55 {strides = array<i32>} : memref<18x32xf32, #tpu.memory_space<vmem>>, vector<16x32xf32>,
    %c0_49 = arith.constant 0 : index
    %c0_50 = arith.constant 0 : index
    %59 = tpu.strided_load %arg13[%c0_49, %c0_50] {strides = array<i32: 2, 1>} : memref<18x32xf32, #tpu.memory_space<vmem>>, vector<8x32xf32>
    %c1_51 = arith.constant 1 : index
    %c0_52 = arith.constant 0 : index
    %60 = tpu.strided_load %arg13[%c1_51, %c0_52] {strides = array<i32: 2, 1>} : memref<18x32xf32, #tpu.memory_space<vmem>>, vector<8x32xf32>
    %c2_53 = arith.constant 2 : index
    %c0_54 = arith.constant 0 : index
    %61 = tpu.strided_load %arg13[%c2_53, %c0_54] {strides = array<i32: 2, 1>} : memref<18x32xf32, #tpu.memory_space<vmem>>, vector<8x32xf32>
    %c3_55 = arith.constant 3 : index
    %c0_56 = arith.constant 0 : index
    %62 = tpu.strided_load %arg13[%c3_55, %c0_56] {strides = array<i32: 2, 1>} : memref<18x32xf32, #tpu.memory_space<vmem>>, vector<8x32xf32>
    %63 = tpu.concatenate %59, %60, %61, %62 in 1 : vector<8x32xf32>, vector<8x32xf32>, vector<8x32xf32>, vector<8x32xf32> -> vector<8x128xf32>
    %c0_57 = arith.constant 0 : index
    %c0_58 = arith.constant 0 : index
    %64 = vector.load %arg4[%c0_57, %c0_58] : memref<128x32xf32, #tpu.memory_space<vmem>>, vector<128x32xf32>
    %cst_59 = arith.constant dense<0.000000e+00> : vector<8x32xf32>
    %65 = tpu.matmul %63, %64, %cst_59 {dimension_numbers = #tpu.dot_dimension_numbers<[1], [0], [0], [1], [0, 0, 1, 1], [], []>} : vector<8x128xf32>, vector<128x32xf32>, vector<8x32xf32> -> vector<8x32xf32>
    %c0_60 = arith.constant 0 : index
    %c0_61 = arith.constant 0 : index
    %66 = vector.load %arg8[%c0_60, %c0_61] : memref<1x32xf32, #tpu.memory_space<vmem>>, vector<1x32xf32>
    %67 = vector.broadcast %66 : vector<1x32xf32> to vector<8x32xf32>
    %68 = arith.addf %65, %67 : vector<8x32xf32>
    %cst_62 = arith.constant 0.000000e+00 : f32
    %69 = vector.broadcast %cst_62 : f32 to vector<8x32xf32>
    %70 = arith.cmpf oge, %68, %69 : vector<8x32xf32>
    %cst_63 = arith.constant 2.000000e-01 : f32
    %71 = vector.broadcast %cst_63 : f32 to vector<8x32xf32>
    %72 = arith.mulf %71, %68 : vector<8x32xf32>
    %73 = arith.select %70, %68, %72 : vector<8x32xi1>, vector<8x32xf32>
    %cst_64 = arith.constant 0.000000e+00 : f32
    %74 = vector.broadcast %cst_64 : f32 to vector<10x32xf32>
    %c0_65 = arith.constant 0 : index
    %c0_66 = arith.constant 0 : index
    %75 = vector.load %arg14[%c0_65, %c0_66] : memref<10x32xf32, #tpu.memory_space<vmem>>, vector<10x32xf32>
    tpu.vector_store %arg14[%c0_65, %c0_66], %74 {strides = array<i32>} : memref<10x32xf32, #tpu.memory_space<vmem>>, vector<10x32xf32>,
    %c1_67 = arith.constant 1 : index
    %c0_68 = arith.constant 0 : index
    %76 = vector.load %arg14[%c1_67, %c0_68] : memref<10x32xf32, #tpu.memory_space<vmem>>, vector<8x32xf32>
    tpu.vector_store %arg14[%c1_67, %c0_68], %73 {strides = array<i32>} : memref<10x32xf32, #tpu.memory_space<vmem>>, vector<8x32xf32>,
    %c0_69 = arith.constant 0 : index
    %c0_70 = arith.constant 0 : index
    %77 = vector.load %arg14[%c0_69, %c0_70] : memref<10x32xf32, #tpu.memory_space<vmem>>, vector<8x32xf32>
    %c1_71 = arith.constant 1 : index
    %c0_72 = arith.constant 0 : index
    %78 = vector.load %arg14[%c1_71, %c0_72] : memref<10x32xf32, #tpu.memory_space<vmem>>, vector<8x32xf32>
    %c2_73 = arith.constant 2 : index
    %c0_74 = arith.constant 0 : index
    %79 = vector.load %arg14[%c2_73, %c0_74] : memref<10x32xf32, #tpu.memory_space<vmem>>, vector<8x32xf32>
    %80 = tpu.concatenate %77, %78, %79 in 1 : vector<8x32xf32>, vector<8x32xf32>, vector<8x32xf32> -> vector<8x96xf32>
    %c0_75 = arith.constant 0 : index
    %c0_76 = arith.constant 0 : index
    %81 = vector.load %arg5[%c0_75, %c0_76] : memref<96x64xf32, #tpu.memory_space<vmem>>, vector<96x64xf32>
    %cst_77 = arith.constant dense<0.000000e+00> : vector<8x64xf32>
    %82 = tpu.matmul %80, %81, %cst_77 {dimension_numbers = #tpu.dot_dimension_numbers<[1], [0], [0], [1], [0, 0, 1, 1], [], []>} : vector<8x96xf32>, vector<96x64xf32>, vector<8x64xf32> -> vector<8x64xf32>
    %c0_78 = arith.constant 0 : index
    %c0_79 = arith.constant 0 : index
    %83 = vector.load %arg9[%c0_78, %c0_79] : memref<1x64xf32, #tpu.memory_space<vmem>>, vector<1x64xf32>
    %84 = vector.broadcast %83 : vector<1x64xf32> to vector<8x64xf32>
    %85 = arith.addf %82, %84 : vector<8x64xf32>
    %c0_80 = arith.constant 0 : index
    %c0_81 = arith.constant 0 : index
    %c0_82 = arith.constant 0 : index
    %86 = vector.load %arg10[%c0_80, %c0_81, %c0_82] : memref<1x8x64xf32, #tpu.memory_space<vmem>>, vector<1x8x64xf32>
    %87 = vector.shape_cast %86 : vector<1x8x64xf32> to vector<8x64xf32>
    %88 = vector.shape_cast %85 : vector<8x64xf32> to vector<1x8x64xf32>
    tpu.vector_store %arg10[%c0_80, %c0_81, %c0_82], %88 {strides = array<i32>} : memref<1x8x64xf32, #tpu.memory_space<vmem>>, vector<1x8x64xf32>,
    return
  }
  func.func @transform_0(%arg0: i32) -> (i32, i32, i32) {
    %c0_i32 = arith.constant 0 : i32
    %c0_i32_0 = arith.constant 0 : i32
    %c0_i32_1 = arith.constant 0 : i32
    return %arg0, %c0_i32, %c0_i32_0 : i32, i32, i32
  }
  func.func @transform_1(%arg0: i32) -> (i32, i32) {
    %c0_i32 = arith.constant 0 : i32
    %c0_i32_0 = arith.constant 0 : i32
    %c0_i32_1 = arith.constant 0 : i32
    return %c0_i32, %c0_i32_0 : i32, i32
  }
  func.func @transform_2(%arg0: i32) -> (i32, i32) {
    %c0_i32 = arith.constant 0 : i32
    %c0_i32_0 = arith.constant 0 : i32
    %c0_i32_1 = arith.constant 0 : i32
    return %c0_i32, %c0_i32_0 : i32, i32
  }
  func.func @transform_3(%arg0: i32) -> (i32, i32) {
    %c0_i32 = arith.constant 0 : i32
    %c0_i32_0 = arith.constant 0 : i32
    %c0_i32_1 = arith.constant 0 : i32
    return %c0_i32, %c0_i32_0 : i32, i32
  }
  func.func @transform_4(%arg0: i32) -> (i32, i32) {
    %c0_i32 = arith.constant 0 : i32
    %c0_i32_0 = arith.constant 0 : i32
    %c0_i32_1 = arith.constant 0 : i32
    return %c0_i32, %c0_i32_0 : i32, i32
  }
  func.func @transform_5(%arg0: i32) -> (i32, i32) {
    %c0_i32 = arith.constant 0 : i32
    %c0_i32_0 = arith.constant 0 : i32
    %c0_i32_1 = arith.constant 0 : i32
    return %c0_i32, %c0_i32_0 : i32, i32
  }
  func.func @transform_6(%arg0: i32) -> (i32, i32) {
    %c0_i32 = arith.constant 0 : i32
    %c0_i32_0 = arith.constant 0 : i32
    %c0_i32_1 = arith.constant 0 : i32
    return %c0_i32, %c0_i32_0 : i32, i32
  }
  func.func @transform_7(%arg0: i32) -> (i32, i32) {
    %c0_i32 = arith.constant 0 : i32
    %c0_i32_0 = arith.constant 0 : i32
    %c0_i32_1 = arith.constant 0 : i32
    return %c0_i32, %c0_i32_0 : i32, i32
  }
  func.func @transform_8(%arg0: i32) -> (i32, i32) {
    %c0_i32 = arith.constant 0 : i32
    %c0_i32_0 = arith.constant 0 : i32
    %c0_i32_1 = arith.constant 0 : i32
    return %c0_i32, %c0_i32_0 : i32, i32
  }
  func.func @transform_9(%arg0: i32) -> (i32, i32, i32) {
    %c0_i32 = arith.constant 0 : i32
    %c0_i32_0 = arith.constant 0 : i32
    %c0_i32_1 = arith.constant 0 : i32
    return %arg0, %c0_i32, %c0_i32_0 : i32, i32, i32
  }
}

</mosaic_0001>

<llo_original>
// kernel: encoder_forward.1
$region0: #{encoder_forward.1}
  #allocation0 [shape = 'u32[]', space=smem, size = 0x4, offset = 0x4, fixed_abs, tag = 'smem constant byte address 0x4 - core index']
  #allocation1 [shape = 'u32[144,128]{1,0:T(1,128)}', space=vmem, size = 0x12000, scoped, tag = 'internal scratch']
  #allocation2 [shape = 'f32[66,1]{1,0:T(8,128)}', space=vmem, size = 0x9000, scoped, tag = 'scratch operand']
  #allocation3 [shape = 'f32[34,32]{1,0:T(8,128)}', space=vmem, size = 0x5000, scoped, tag = 'scratch operand']
  #allocation4 [shape = 'f32[18,32]{1,0:T(8,128)}', space=vmem, size = 0x3000, scoped, tag = 'scratch operand']
  #allocation5 [shape = 'f32[10,32]{1,0:T(8,128)}', space=vmem, size = 0x2000, scoped, tag = 'scratch operand']
  %s0 = inlined_call_operand.vmem [shape: f32[2,64,1], index: 0, kind: input, shape index: {}]
  %s1 = inlined_call_operand.vmem [shape: f32[4,32], index: 1, kind: input, shape index: {}]
  %s2 = inlined_call_operand.vmem [shape: f32[128,32], index: 2, kind: input, shape index: {}]
  %s3 = inlined_call_operand.vmem [shape: f32[128,32], index: 3, kind: input, shape index: {}]
  %s4 = inlined_call_operand.vmem [shape: f32[96,64], index: 4, kind: input, shape index: {}]
  %s5 = inlined_call_operand.vmem [shape: f32[1,32], index: 5, kind: input, shape index: {}]
  %s6 = inlined_call_operand.vmem [shape: f32[1,32], index: 6, kind: input, shape index: {}]
  %s7 = inlined_call_operand.vmem [shape: f32[1,32], index: 7, kind: input, shape index: {}]
  %s8 = inlined_call_operand.vmem [shape: f32[1,64], index: 8, kind: input, shape index: {}]
  %s9 = inlined_call_operand.hbm [shape: f32[2,8,64], index: 9, kind: output, shape index: {}]
  %s10 = sld [smem:[#allocation0]]
  $region69: #{encoder_forward.1} parent=0
    _
  %s12 = ssub.s32 1, %s10
  %s13 = scalar_select 0, %s12, %s10
  $region1: #{encoder_forward.1} parent=0
    #allocation6 [shape = 'u8[8192]{0}', space=vmem, size = 0x2000, scoped, tag = 'output window, operand 0']
    #allocation7 [shape = 's32[2]{0}', space=sflag, size = 0x8, scoped, tag = 'scoped memory for encoder_forward.1']
    %14 = vsyncpa [#allocation7], 0
    %s15 = scalar_lea.sflag [#allocation7], 1
    %16 = vsyncpa %s15, 0
    loop: start=0, step=1, limit=4
    $region2: #{encoder_forward.1} parent=1 // loop_pre_header
      _
    $region3: #{encoder_forward.1} parent=1 // loop_header
      %s18 = sphi 0, %s22
      %p19 = scmp.ge.s32.totalorder %s18, 4
      %s28 = sphi 0, %s30
      %s31 = sphi 0, %s28
      %s32 = sphi 0, %s31
      %s48 = sphi 0, %s32
      %s52 = sphi 0, %s52
      %s54 = sphi 0, %s52
      %s55 = sphi 0, %s54
      %s69 = sphi 0, %s55
      %s73 = sphi 0, %s73
      %s75 = sphi 0, %s73
      %s76 = sphi 0, %s75
      %s90 = sphi 0, %s76
      %s94 = sphi 0, %s94
      %s96 = sphi 0, %s94
      %s97 = sphi 0, %s96
      %s111 = sphi 0, %s97
      %s115 = sphi 0, %s115
      %s117 = sphi 0, %s115
      %s118 = sphi 0, %s117
      %s132 = sphi 0, %s118
      %s136 = sphi 0, %s136
      %s138 = sphi 0, %s136
      %s139 = sphi 0, %s138
      %s153 = sphi 0, %s139
      %s157 = sphi 0, %s157
      %s159 = sphi 0, %s157
      %s160 = sphi 0, %s159
      %s174 = sphi 0, %s160
      %s178 = sphi 0, %s178
      %s180 = sphi 0, %s178
      %s181 = sphi 0, %s180
      %s195 = sphi 0, %s181
      %s199 = sphi 0, %s199
      %s201 = sphi 0, %s199
      %s202 = sphi 0, %s201
      %s216 = sphi 0, %s202
      %s222 = sphi 0, %s224
      %s225 = sphi 0, %s222
      %s226 = sphi 0, %s225
      %s242 = sphi 0, %s226
    $region4: #{encoder_forward.1} parent=1 // loop_header_branch
      %21 = sbr.rel (%p19) target = $region8
    $region5: #{encoder_forward.1} parent=1 // loop_body
      %s23 = ssub.s32 %s18, 1
      %s24 = ssub.s32 %s18, 2
      %s25 = sadd.s32 %s18, 1
      %s26 = ssub.s32 %s18, %s25
      %p27 = scmp.eq.s32.totalorder %s26, 0
      %s29 = sadd.s32 %s28, 1
      %s30 = scalar_select %p27, %s28, %s29
      %p33 = pneg %p27
      %p34 = scmp.eq.s32.totalorder %s18, 1
      %p35 = por %p33, %p34
      %p36 = scmp.ne.s32.totalorder %s28, %s31
      %p37 = scmp.eq.s32.totalorder %s18, 0
      %p38 = por %p36, %p37
      %p39 = scmp.ne.s32.totalorder %s28, %s31
      %p40 = scmp.eq.s32.totalorder %s23, 1
      %p41 = por %p39, %p40
      %p42 = scmp.ne.s32.totalorder %s31, %s32
      %p43 = scmp.eq.s32.totalorder %s23, 0
      %p44 = por %p42, %p43
      %p45 = scmp.ne.s32.totalorder %s31, %s32
      %p46 = scmp.eq.s32.totalorder %s24, 1
      %p47 = por %p45, %p46
      %p49 = scmp.ne.s32.totalorder %s32, %s48
      %p50 = scmp.eq.s32.totalorder %s24, 0
      %p51 = por %p49, %p50
      %s53 = sadd.s32 %s52, 1
      %p56 = scmp.eq.s32.totalorder %s18, 1
      %p57 = scmp.ne.s32.totalorder %s52, %s54
      %p58 = scmp.eq.s32.totalorder %s18, 0
      %p59 = por %p57, %p58
      %p60 = scmp.ne.s32.totalorder %s52, %s54
      %p61 = scmp.eq.s32.totalorder %s23, 1
      %p62 = por %p60, %p61
      %p63 = scmp.ne.s32.totalorder %s54, %s55
      %p64 = scmp.eq.s32.totalorder %s23, 0
      %p65 = por %p63, %p64
      %p66 = scmp.ne.s32.totalorder %s54, %s55
      %p67 = scmp.eq.s32.totalorder %s24, 1
      %p68 = por %p66, %p67
      %p70 = scmp.ne.s32.totalorder %s55, %s69
      %p71 = scmp.eq.s32.totalorder %s24, 0
      %p72 = por %p70, %p71
      %s74 = sadd.s32 %s73, 1
      %p77 = scmp.eq.s32.totalorder %s18, 1
      %p78 = scmp.ne.s32.totalorder %s73, %s75
      %p79 = scmp.eq.s32.totalorder %s18, 0
      %p80 = por %p78, %p79
      %p81 = scmp.ne.s32.totalorder %s73, %s75
      %p82 = scmp.eq.s32.totalorder %s23, 1
      %p83 = por %p81, %p82
      %p84 = scmp.ne.s32.totalorder %s75, %s76
      %p85 = scmp.eq.s32.totalorder %s23, 0
      %p86 = por %p84, %p85
      %p87 = scmp.ne.s32.totalorder %s75, %s76
      %p88 = scmp.eq.s32.totalorder %s24, 1
      %p89 = por %p87, %p88
      %p91 = scmp.ne.s32.totalorder %s76, %s90
      %p92 = scmp.eq.s32.totalorder %s24, 0
      %p93 = por %p91, %p92
      %s95 = sadd.s32 %s94, 1
      %p98 = scmp.eq.s32.totalorder %s18, 1
      %p99 = scmp.ne.s32.totalorder %s94, %s96
      %p100 = scmp.eq.s32.totalorder %s18, 0
      %p101 = por %p99, %p100
      %p102 = scmp.ne.s32.totalorder %s94, %s96
      %p103 = scmp.eq.s32.totalorder %s23, 1
      %p104 = por %p102, %p103
      %p105 = scmp.ne.s32.totalorder %s96, %s97
      %p106 = scmp.eq.s32.totalorder %s23, 0
      %p107 = por %p105, %p106
      %p108 = scmp.ne.s32.totalorder %s96, %s97
      %p109 = scmp.eq.s32.totalorder %s24, 1
      %p110 = por %p108, %p109
      %p112 = scmp.ne.s32.totalorder %s97, %s111
      %p113 = scmp.eq.s32.totalorder %s24, 0
      %p114 = por %p112, %p113
      %s116 = sadd.s32 %s115, 1
      %p119 = scmp.eq.s32.totalorder %s18, 1
      %p120 = scmp.ne.s32.totalorder %s115, %s117
      %p121 = scmp.eq.s32.totalorder %s18, 0
      %p122 = por %p120, %p121
      %p123 = scmp.ne.s32.totalorder %s115, %s117
      %p124 = scmp.eq.s32.totalorder %s23, 1
      %p125 = por %p123, %p124
      %p126 = scmp.ne.s32.totalorder %s117, %s118
      %p127 = scmp.eq.s32.totalorder %s23, 0
      %p128 = por %p126, %p127
      %p129 = scmp.ne.s32.totalorder %s117, %s118
      %p130 = scmp.eq.s32.totalorder %s24, 1
      %p131 = por %p129, %p130
      %p133 = scmp.ne.s32.totalorder %s118, %s132
      %p134 = scmp.eq.s32.totalorder %s24, 0
      %p135 = por %p133, %p134
      %s137 = sadd.s32 %s136, 1
      %p140 = scmp.eq.s32.totalorder %s18, 1
      %p141 = scmp.ne.s32.totalorder %s136, %s138
      %p142 = scmp.eq.s32.totalorder %s18, 0
      %p143 = por %p141, %p142
      %p144 = scmp.ne.s32.totalorder %s136, %s138
      %p145 = scmp.eq.s32.totalorder %s23, 1
      %p146 = por %p144, %p145
      %p147 = scmp.ne.s32.totalorder %s138, %s139
      %p148 = scmp.eq.s32.totalorder %s23, 0
      %p149 = por %p147, %p148
      %p150 = scmp.ne.s32.totalorder %s138, %s139
      %p151 = scmp.eq.s32.totalorder %s24, 1
      %p152 = por %p150, %p151
      %p154 = scmp.ne.s32.totalorder %s139, %s153
      %p155 = scmp.eq.s32.totalorder %s24, 0
      %p156 = por %p154, %p155
      %s158 = sadd.s32 %s157, 1
      %p161 = scmp.eq.s32.totalorder %s18, 1
      %p162 = scmp.ne.s32.totalorder %s157, %s159
      %p163 = scmp.eq.s32.totalorder %s18, 0
      %p164 = por %p162, %p163
      %p165 = scmp.ne.s32.totalorder %s157, %s159
      %p166 = scmp.eq.s32.totalorder %s23, 1
      %p167 = por %p165, %p166
      %p168 = scmp.ne.s32.totalorder %s159, %s160
      %p169 = scmp.eq.s32.totalorder %s23, 0
      %p170 = por %p168, %p169
      %p171 = scmp.ne.s32.totalorder %s159, %s160
      %p172 = scmp.eq.s32.totalorder %s24, 1
      %p173 = por %p171, %p172
      %p175 = scmp.ne.s32.totalorder %s160, %s174
      %p176 = scmp.eq.s32.totalorder %s24, 0
      %p177 = por %p175, %p176
      %s179 = sadd.s32 %s178, 1
      %p182 = scmp.eq.s32.totalorder %s18, 1
      %p183 = scmp.ne.s32.totalorder %s178, %s180
      %p184 = scmp.eq.s32.totalorder %s18, 0
      %p185 = por %p183, %p184
      %p186 = scmp.ne.s32.totalorder %s178, %s180
      %p187 = scmp.eq.s32.totalorder %s23, 1
      %p188 = por %p186, %p187
      %p189 = scmp.ne.s32.totalorder %s180, %s181
      %p190 = scmp.eq.s32.totalorder %s23, 0
      %p191 = por %p189, %p190
      %p192 = scmp.ne.s32.totalorder %s180, %s181
      %p193 = scmp.eq.s32.totalorder %s24, 1
      %p194 = por %p192, %p193
      %p196 = scmp.ne.s32.totalorder %s181, %s195
      %p197 = scmp.eq.s32.totalorder %s24, 0
      %p198 = por %p196, %p197
      %s200 = sadd.s32 %s199, 1
      %p203 = scmp.eq.s32.totalorder %s18, 1
      %p204 = scmp.ne.s32.totalorder %s199, %s201
      %p205 = scmp.eq.s32.totalorder %s18, 0
      %p206 = por %p204, %p205
      %p207 = scmp.ne.s32.totalorder %s199, %s201
      %p208 = scmp.eq.s32.totalorder %s23, 1
      %p209 = por %p207, %p208
      %p210 = scmp.ne.s32.totalorder %s201, %s202
      %p211 = scmp.eq.s32.totalorder %s23, 0
      %p212 = por %p210, %p211
      %p213 = scmp.ne.s32.totalorder %s201, %s202
      %p214 = scmp.eq.s32.totalorder %s24, 1
      %p215 = por %p213, %p214
      %p217 = scmp.ne.s32.totalorder %s202, %s216
      %p218 = scmp.eq.s32.totalorder %s24, 0
      %p219 = por %p217, %p218
      %s220 = ssub.s32 %s18, %s25
      %p221 = scmp.eq.s32.totalorder %s220, 0
      %s223 = sadd.s32 %s222, 1
      %s224 = scalar_select %p221, %s222, %s223
      %p227 = pneg %p221
      %p228 = scmp.eq.s32.totalorder %s18, 1
      %p229 = por %p227, %p228
      %p230 = scmp.ne.s32.totalorder %s222, %s225
      %p231 = scmp.eq.s32.totalorder %s18, 0
      %p232 = por %p230, %p231
      %p233 = scmp.ne.s32.totalorder %s222, %s225
      %p234 = scmp.eq.s32.totalorder %s23, 1
      %p235 = por %p233, %p234
      %p236 = scmp.ne.s32.totalorder %s225, %s226
      %p237 = scmp.eq.s32.totalorder %s23, 0
      %p238 = por %p236, %p237
      %p239 = scmp.ne.s32.totalorder %s225, %s226
      %p240 = scmp.eq.s32.totalorder %s24, 1
      %p241 = por %p239, %p240
      %p243 = scmp.ne.s32.totalorder %s226, %s242
      %p244 = scmp.eq.s32.totalorder %s24, 0
      %p245 = por %p243, %p244
      %p246 = scmp.le.s32.totalorder 1, %s18
      %p247 = scmp.lt.s32.totalorder %s18, 3
      %p248 = pnand %p246, %p247
      %p249 = pneg %p248
      // Predicated region
      $region9: #{encoder_forward.1} parent=5 // pred_check
        _
      $region10: #{encoder_forward.1} parent=5 // pred_check_branch
        %251 = sbr.rel (%p248) target = $region12
      $region11: #{encoder_forward.1} parent=5 // pred_region
        %s252 = ssub.s32 %s18, 1
        // Predicated region
        $region13: #{encoder_forward.1} parent=11 // pred_check
          %p253 = pneg %p65
        $region14: #{encoder_forward.1} parent=11 // pred_check_branch
          %255 = sbr.rel (%p253) target = $region16
        $region15: #{encoder_forward.1} parent=11 // pred_region
          _
        $region16: #{encoder_forward.1} parent=11 // pred_fallthru
          _
        // Predicated region
        $region17: #{encoder_forward.1} parent=11 // pred_check
          %p256 = pneg %p86
        $region18: #{encoder_forward.1} parent=11 // pred_check_branch
          %258 = sbr.rel (%p256) target = $region20
        $region19: #{encoder_forward.1} parent=11 // pred_region
          _
        $region20: #{encoder_forward.1} parent=11 // pred_fallthru
          _
        // Predicated region
        $region21: #{encoder_forward.1} parent=11 // pred_check
          %p259 = pneg %p107
        $region22: #{encoder_forward.1} parent=11 // pred_check_branch
          %261 = sbr.rel (%p259) target = $region24
        $region23: #{encoder_forward.1} parent=11 // pred_region
          _
        $region24: #{encoder_forward.1} parent=11 // pred_fallthru
          _
        // Predicated region
        $region25: #{encoder_forward.1} parent=11 // pred_check
          %p262 = pneg %p128
        $region26: #{encoder_forward.1} parent=11 // pred_check_branch
          %264 = sbr.rel (%p262) target = $region28
        $region27: #{encoder_forward.1} parent=11 // pred_region
          _
        $region28: #{encoder_forward.1} parent=11 // pred_fallthru
          _
        // Predicated region
        $region29: #{encoder_forward.1} parent=11 // pred_check
          %p265 = pneg %p149
        $region30: #{encoder_forward.1} parent=11 // pred_check_branch
          %267 = sbr.rel (%p265) target = $region32
        $region31: #{encoder_forward.1} parent=11 // pred_region
          _
        $region32: #{encoder_forward.1} parent=11 // pred_fallthru
          _
        // Predicated region
        $region33: #{encoder_forward.1} parent=11 // pred_check
          %p268 = pneg %p170
        $region34: #{encoder_forward.1} parent=11 // pred_check_branch
          %270 = sbr.rel (%p268) target = $region36
        $region35: #{encoder_forward.1} parent=11 // pred_region
          _
        $region36: #{encoder_forward.1} parent=11 // pred_fallthru
          _
        // Predicated region
        $region37: #{encoder_forward.1} parent=11 // pred_check
          %p271 = pneg %p191
        $region38: #{encoder_forward.1} parent=11 // pred_check_branch
          %273 = sbr.rel (%p271) target = $region40
        $region39: #{encoder_forward.1} parent=11 // pred_region
          _
        $region40: #{encoder_forward.1} parent=11 // pred_fallthru
          _
        // Predicated region
        $region41: #{encoder_forward.1} parent=11 // pred_check
          %p274 = pneg %p212
        $region42: #{encoder_forward.1} parent=11 // pred_check_branch
          %276 = sbr.rel (%p274) target = $region44
        $region43: #{encoder_forward.1} parent=11 // pred_region
          _
        $region44: #{encoder_forward.1} parent=11 // pred_fallthru
          _
      $region12: #{encoder_forward.1} parent=5 // pred_fallthru
        _
      %p277 = scmp.lt.s32.totalorder %s18, 2
      // Predicated region
      $region45: #{encoder_forward.1} parent=5 // pred_check
        %p278 = pneg %p277
      $region46: #{encoder_forward.1} parent=5 // pred_check_branch
        %280 = sbr.rel (%p278) target = $region48
      $region47: #{encoder_forward.1} parent=5 // pred_region
        // Predicated region
        $region49: #{encoder_forward.1} parent=47 // pred_check
          %p281 = pneg %p38
        $region50: #{encoder_forward.1} parent=47 // pred_check_branch
          %283 = sbr.rel (%p281) target = $region52
        $region51: #{encoder_forward.1} parent=47 // pred_region
          %p284 = scmp.lt.s32.totalorder %s18, 1
          %s285 = scalar_select %p284, %s18, 1
          %s286 = smul.addr %s285, 8
          %s287 = smul.addr %s286, 8
          %s288 = scalar_lea.vmem %s0, %s287
        $region52: #{encoder_forward.1} parent=47 // pred_fallthru
          _
      $region48: #{encoder_forward.1} parent=5 // pred_fallthru
        _
      %p289 = scmp.le.s32.totalorder 1, %s18
      %p290 = scmp.lt.s32.totalorder %s18, 3
      %p291 = pnand %p289, %p290
      %p292 = pneg %p291
      // Predicated region
      $region53: #{encoder_forward.1} parent=5 // pred_check
        _
      $region54: #{encoder_forward.1} parent=5 // pred_check_branch
        %294 = sbr.rel (%p291) target = $region56
      $region55: #{encoder_forward.1} parent=5 // pred_region
        %s295 = ssub.s32 %s18, 1
        %p296 = scmp.lt.s32.totalorder %s23, 1
        %s297 = scalar_select %p296, %s23, 1
        %s298 = smul.addr %s297, 8
        %s299 = smul.addr %s298, 8
        %s300 = scalar_lea.vmem %s0, %s299
        %p301 = pneg %p44
        %p302 = pneg %p41
        %p303 = pneg %p65
        %p304 = pneg %p62
        %p305 = pneg %p86
        %p306 = pneg %p83
        %p307 = pneg %p107
        %p308 = pneg %p104
        %p309 = pneg %p128
        %p310 = pneg %p125
        %p311 = pneg %p149
        %p312 = pneg %p146
        %p313 = pneg %p170
        %p314 = pneg %p167
        %p315 = pneg %p191
        %p316 = pneg %p188
        %p317 = pneg %p212
        %p318 = pneg %p209
        %p319 = pneg %p238
        %p320 = pneg %p235
        %s321 = sand.u32 %s225, 1
        %s322 = scalar_lea.sflag [#allocation7], %s321
        %s323 = sand.u32 %s225, 1
        %s324 = smul.addr %s323, 8
        %s325 = scalar_lea.vmem [#allocation6], %s324
        %p326 = scmp.lt.s32.totalorder %s23, 1
        %s327 = scalar_select %p326, %s23, 1
        %s328 = smul.addr %s327, 8
        %s329 = smul.addr %s328, 8
        %s330 = scalar_lea.vmem %s0, %s329
        %vm331 = vcmask 7168
        %332 = vst.msk [vmem:[#allocation2] sm:$0xff] %vm331, 0.0
        %333 = vst.msk [vmem:[#allocation2 + $0x8] sm:$0xff] %vm331, 0.0
        %334 = vst.msk [vmem:[#allocation2 + $0x10] sm:$0xff] %vm331, 0.0
        %335 = vst.msk [vmem:[#allocation2 + $0x18] sm:$0xff] %vm331, 0.0
        %336 = vst.msk [vmem:[#allocation2 + $0x20] sm:$0xff] %vm331, 0.0
        %337 = vst.msk [vmem:[#allocation2 + $0x28] sm:$0xff] %vm331, 0.0
        %338 = vst.msk [vmem:[#allocation2 + $0x30] sm:$0xff] %vm331, 0.0
        %339 = vst.msk [vmem:[#allocation2 + $0x38] sm:$0xff] %vm331, 0.0
        %vm340 = vcmask 1024
        %341 = vst.msk [vmem:[#allocation2 + $0x40] sm:$0x3] %vm340, 0.0
        %v342 = vld [vmem:[%s330] sm:$0xff]
        %v343 = vld [vmem:[%s330 + $0x8] sm:$0xff]
        %v344 = vld [vmem:[%s330 + $0x10] sm:$0xff]
        %v345 = vld [vmem:[%s330 + $0x18] sm:$0xff]
        %v346 = vld [vmem:[%s330 + $0x20] sm:$0xff]
        %v347 = vld [vmem:[%s330 + $0x28] sm:$0xff]
        %v348 = vld [vmem:[%s330 + $0x30] sm:$0xff]
        %v349 = vld [vmem:[%s330 + $0x38] sm:$0xff]
        %350 = vst.msk [vmem:[#allocation2 + $0x1] sm:$0xff] %vm331, %v342
        %351 = vst.msk [vmem:[#allocation2 + $0x9] sm:$0xff] %vm331, %v343
        %352 = vst.msk [vmem:[#allocation2 + $0x11] sm:$0xff] %vm331, %v344
        %353 = vst.msk [vmem:[#allocation2 + $0x19] sm:$0xff] %vm331, %v345
        %354 = vst.msk [vmem:[#allocation2 + $0x21] sm:$0xff] %vm331, %v346
        %355 = vst.msk [vmem:[#allocation2 + $0x29] sm:$0xff] %vm331, %v347
        %356 = vst.msk [vmem:[#allocation2 + $0x31] sm:$0xff] %vm331, %v348
        %357 = vst.msk [vmem:[#allocation2 + $0x39] sm:$0xff] %vm331, %v349
        %v358 = vld [vmem:[%s5] sm:$0x1]
        %v360 = vlaneseq
        %v361 = vshrl.u32 %v360, 7
        %v362 = vsub.s32 0, %v361
        %v363 = vrot.slane %v358, %v362
        %v365 = vadd.f32 %v363, 0.0
        %v366 = vld [vmem:[#allocation2] ss:$2 sm:$0xff]
        %s367 = scalar_lea.vmem [#allocation2], 16
        %v368 = vld [vmem:[%s367] ss:$2 sm:$0xff]
        %s369 = scalar_lea.vmem [#allocation2], 32
        %v370 = vld [vmem:[%s369] ss:$2 sm:$0xff]
        %s371 = scalar_lea.vmem [#allocation2], 48
        %v372 = vld [vmem:[%s371] ss:$2 sm:$0xff]
        %v373 = vld [vmem:[%s1] sm:$0x1]
        %375 = vset.pattern.permute.xlu0 0
        %376 = vperm.xlu0 %375, %v366
        %v377 = vpop.permute.xlu0 %376
        %380 = vset.pattern.permute.xlu0 0
        %381 = vperm.xlu0 %380, %v368
        %v382 = vpop.permute.xlu0 %381
        %385 = vset.pattern.permute.xlu0 0
        %386 = vperm.xlu0 %385, %v370
        %v387 = vpop.permute.xlu0 %386
        %390 = vset.pattern.permute.xlu0 0
        %391 = vperm.xlu0 %390, %v372
        %v392 = vpop.permute.xlu0 %391
        %v394 = vlaneseq
        %v395 = vshrl.u32 %v394, 7
        %v396 = vsub.s32 0, %v395
        %v397 = vrot.slane %v373, %v396
        %v398 = vmul.f32 %v377, %v397
        %v399 = vmul.f32 %v382, %v397
        %v400 = vmul.f32 %v387, %v397
        %v401 = vmul.f32 %v392, %v397
        %v402 = vadd.f32 %v365, %v398
        %v403 = vadd.f32 %v365, %v399
        %v404 = vadd.f32 %v365, %v400
        %v405 = vadd.f32 %v365, %v401
        %s406 = scalar_lea.vmem [#allocation2], 1
        %v407 = vld [vmem:[%s406] ss:$2 sm:$0xff]
        %s408 = scalar_lea.vmem [#allocation2], 17
        %v409 = vld [vmem:[%s408] ss:$2 sm:$0xff]
        %s410 = scalar_lea.vmem [#allocation2], 33
        %v411 = vld [vmem:[%s410] ss:$2 sm:$0xff]
        %s412 = scalar_lea.vmem [#allocation2], 49
        %v413 = vld [vmem:[%s412] ss:$2 sm:$0xff]
        %v414 = vld [vmem:[%s1 + $0x1] sm:$0x1]
        %416 = vset.pattern.permute.xlu0 0
        %417 = vperm.xlu0 %416, %v407
        %v418 = vpop.permute.xlu0 %417
        %421 = vset.pattern.permute.xlu0 0
        %422 = vperm.xlu0 %421, %v409
        %v423 = vpop.permute.xlu0 %422
        %426 = vset.pattern.permute.xlu0 0
        %427 = vperm.xlu0 %426, %v411
        %v428 = vpop.permute.xlu0 %427
        %431 = vset.pattern.permute.xlu0 0
        %432 = vperm.xlu0 %431, %v413
        %v433 = vpop.permute.xlu0 %432
        %v435 = vlaneseq
        %v436 = vshrl.u32 %v435, 7
        %v437 = vsub.s32 0, %v436
        %v438 = vrot.slane %v414, %v437
        %v439 = vmul.f32 %v418, %v438
        %v440 = vmul.f32 %v423, %v438
        %v441 = vmul.f32 %v428, %v438
        %v442 = vmul.f32 %v433, %v438
        %v443 = vadd.f32 %v402, %v439
        %v444 = vadd.f32 %v403, %v440
        %v445 = vadd.f32 %v404, %v441
        %v446 = vadd.f32 %v405, %v442
        %s447 = scalar_lea.vmem [#allocation2], 2
        %v448 = vld [vmem:[%s447] ss:$2 sm:$0xff]
        %s449 = scalar_lea.vmem [#allocation2], 18
        %v450 = vld [vmem:[%s449] ss:$2 sm:$0xff]
        %s451 = scalar_lea.vmem [#allocation2], 34
        %v452 = vld [vmem:[%s451] ss:$2 sm:$0xff]
        %s453 = scalar_lea.vmem [#allocation2], 50
        %v454 = vld [vmem:[%s453] ss:$2 sm:$0xff]
        %v455 = vld [vmem:[%s1 + $0x2] sm:$0x1]
        %457 = vset.pattern.permute.xlu0 0
        %458 = vperm.xlu0 %457, %v448
        %v459 = vpop.permute.xlu0 %458
        %462 = vset.pattern.permute.xlu0 0
        %463 = vperm.xlu0 %462, %v450
        %v464 = vpop.permute.xlu0 %463
        %467 = vset.pattern.permute.xlu0 0
        %468 = vperm.xlu0 %467, %v452
        %v469 = vpop.permute.xlu0 %468
        %472 = vset.pattern.permute.xlu0 0
        %473 = vperm.xlu0 %472, %v454
        %v474 = vpop.permute.xlu0 %473
        %v476 = vlaneseq
        %v477 = vshrl.u32 %v476, 7
        %v478 = vsub.s32 0, %v477
        %v479 = vrot.slane %v455, %v478
        %v480 = vmul.f32 %v459, %v479
        %v481 = vmul.f32 %v464, %v479
        %v482 = vmul.f32 %v469, %v479
        %v483 = vmul.f32 %v474, %v479
        %v484 = vadd.f32 %v443, %v480
        %v485 = vadd.f32 %v444, %v481
        %v486 = vadd.f32 %v445, %v482
        %v487 = vadd.f32 %v446, %v483
        %s488 = scalar_lea.vmem [#allocation2], 3
        %v489 = vld [vmem:[%s488] ss:$2 sm:$0xff]
        %s490 = scalar_lea.vmem [#allocation2], 19
        %v491 = vld [vmem:[%s490] ss:$2 sm:$0xff]
        %s492 = scalar_lea.vmem [#allocation2], 35
        %v493 = vld [vmem:[%s492] ss:$2 sm:$0xff]
        %s494 = scalar_lea.vmem [#allocation2], 51
        %v495 = vld [vmem:[%s494] ss:$2 sm:$0xff]
        %v496 = vld [vmem:[%s1 + $0x3] sm:$0x1]
        %498 = vset.pattern.permute.xlu0 0
        %499 = vperm.xlu0 %498, %v489
        %v500 = vpop.permute.xlu0 %499
        %503 = vset.pattern.permute.xlu0 0
        %504 = vperm.xlu0 %503, %v491
        %v505 = vpop.permute.xlu0 %504
        %508 = vset.pattern.permute.xlu0 0
        %509 = vperm.xlu0 %508, %v493
        %v510 = vpop.permute.xlu0 %509
        %513 = vset.pattern.permute.xlu0 0
        %514 = vperm.xlu0 %513, %v495
        %v515 = vpop.permute.xlu0 %514
        %v517 = vlaneseq
        %v518 = vshrl.u32 %v517, 7
        %v519 = vsub.s32 0, %v518
        %v520 = vrot.slane %v496, %v519
        %v521 = vmul.f32 %v500, %v520
        %v522 = vmul.f32 %v505, %v520
        %v523 = vmul.f32 %v510, %v520
        %v524 = vmul.f32 %v515, %v520
        %v525 = vadd.f32 %v484, %v521
        %v526 = vadd.f32 %v485, %v522
        %v527 = vadd.f32 %v486, %v523
        %v528 = vadd.f32 %v487, %v524
        %vm529 = vcmp.ge.f32.partialorder %v525, 0.0
        %vm530 = vcmp.ge.f32.partialorder %v526, 0.0
        %vm531 = vcmp.ge.f32.partialorder %v527, 0.0
        %vm532 = vcmp.ge.f32.partialorder %v528, 0.0
        %v533 = vmul.f32 %v525, 0.2
        %v534 = vmul.f32 %v526, 0.2
        %v535 = vmul.f32 %v527, 0.2
        %v536 = vmul.f32 %v528, 0.2
        %v537 = vsel %vm529, %v525, %v533
        %v538 = vsel %vm530, %v526, %v534
        %v539 = vsel %vm531, %v527, %v535
        %v540 = vsel %vm532, %v528, %v536
        %vm541 = vcmask 261120
        %542 = vst.msk [vmem:[#allocation3] sm:$0xff] %vm541, 0.0
        %543 = vst.msk [vmem:[#allocation3 + $0x8] sm:$0xff] %vm541, 0.0
        %544 = vst.msk [vmem:[#allocation3 + $0x10] sm:$0xff] %vm541, 0.0
        %545 = vst.msk [vmem:[#allocation3 + $0x18] sm:$0xff] %vm541, 0.0
        %vm546 = vcmask 254976
        %547 = vst.msk [vmem:[#allocation3 + $0x20] sm:$0x3] %vm546, 0.0
        %548 = vst.msk [vmem:[#allocation3 + $0x1] sm:$0xff] %vm541, %v537
        %549 = vst.msk [vmem:[#allocation3 + $0x9] sm:$0xff] %vm541, %v538
        %550 = vst.msk [vmem:[#allocation3 + $0x11] sm:$0xff] %vm541, %v539
        %551 = vst.msk [vmem:[#allocation3 + $0x19] sm:$0xff] %vm541, %v540
        %v552 = vld [vmem:[#allocation3] ss:$2 sm:$0xff]
        %s553 = scalar_lea.vmem [#allocation3], 16
        %v554 = vld [vmem:[%s553] ss:$2 sm:$0xff]
        %s555 = scalar_lea.vmem [#allocation3], 1
        %v556 = vld [vmem:[%s555] ss:$2 sm:$0xff]
        %s557 = scalar_lea.vmem [#allocation3], 17
        %v558 = vld [vmem:[%s557] ss:$2 sm:$0xff]
        %s559 = scalar_lea.vmem [#allocation3], 2
        %v560 = vld [vmem:[%s559] ss:$2 sm:$0xff]
        %s561 = scalar_lea.vmem [#allocation3], 18
        %v562 = vld [vmem:[%s561] ss:$2 sm:$0xff]
        %s563 = scalar_lea.vmem [#allocation3], 3
        %v564 = vld [vmem:[%s563] ss:$2 sm:$0xff]
        %s565 = scalar_lea.vmem [#allocation3], 19
        %v566 = vld [vmem:[%s565] ss:$2 sm:$0xff]
        %569 = vrot.lane.b32.xlu0 %v556, 32
        %v570 = vpop.permute.xlu0 %569
        %571 = vrot.lane.b32.xlu0 %v558, 32
        %v572 = vpop.permute.xlu0 %571
        %577 = vrot.lane.b32.xlu0 %v560, 64
        %v578 = vpop.permute.xlu0 %577
        %579 = vrot.lane.b32.xlu0 %v562, 64
        %v580 = vpop.permute.xlu0 %579
        %585 = vrot.lane.b32.xlu0 %v564, 96
        %v586 = vpop.permute.xlu0 %585
        %587 = vrot.lane.b32.xlu0 %v566, 96
        %v588 = vpop.permute.xlu0 %587
        %v591 = vsel %vm541, %v552, %v570
        %v592 = vsel %vm541, %v554, %v572
        %vm593 = vcmask 523264
        %v594 = vsel %vm593, %v591, %v578
        %v595 = vsel %vm593, %v592, %v580
        %vm596 = vcmask 785408
        %v597 = vsel %vm596, %v594, %v586
        %v598 = vsel %vm596, %v595, %v588
        %v599 = vld [vmem:[%s2] sm:$0xff]
        %v600 = vld [vmem:[%s2 + $0x8] sm:$0xff]
        %v601 = vld [vmem:[%s2 + $0x10] sm:$0xff]
        %v602 = vld [vmem:[%s2 + $0x18] sm:$0xff]
        %v603 = vld [vmem:[%s2 + $0x20] sm:$0xff]
        %v604 = vld [vmem:[%s2 + $0x28] sm:$0xff]
        %v605 = vld [vmem:[%s2 + $0x30] sm:$0xff]
        %v606 = vld [vmem:[%s2 + $0x38] sm:$0xff]
        %v607 = vld [vmem:[%s2 + $0x40] sm:$0xff]
        %v608 = vld [vmem:[%s2 + $0x48] sm:$0xff]
        %v609 = vld [vmem:[%s2 + $0x50] sm:$0xff]
        %v610 = vld [vmem:[%s2 + $0x58] sm:$0xff]
        %v611 = vld [vmem:[%s2 + $0x60] sm:$0xff]
        %v612 = vld [vmem:[%s2 + $0x68] sm:$0xff]
        %v613 = vld [vmem:[%s2 + $0x70] sm:$0xff]
        %v614 = vld [vmem:[%s2 + $0x78] sm:$0xff]
        %v615 = vld [vmem:[%s6] sm:$0x1]
        %v617 = vlaneseq
        %v618 = vshrl.u32 %v617, 7
        %v619 = vsub.s32 0, %v618
        %v620 = vrot.slane %v615, %v619
        %622 = vmatprep.subr.mxu0 0.0
        %623 = vmatpush1.msra.mxu0 %v599
        %624 = vmatprep.subr.mxu0 0.0
        %625 = vmatpush1.msra.mxu0 %v600
        %626 = vmatprep.subr.mxu0 0.0
        %627 = vmatpush1.msra.mxu0 %v601
        %628 = vmatprep.subr.mxu0 0.0
        %629 = vmatpush1.msra.mxu0 %v602
        %630 = vmatprep.subr.mxu0 0.0
        %631 = vmatpush1.msra.mxu0 %v603
        %632 = vmatprep.subr.mxu0 0.0
        %633 = vmatpush1.msra.mxu0 %v604
        %634 = vmatprep.subr.mxu0 0.0
        %635 = vmatpush1.msra.mxu0 %v605
        %636 = vmatprep.subr.mxu0 0.0
        %637 = vmatpush1.msra.mxu0 %v606
        %638 = vmatprep.subr.mxu0 0.0
        %639 = vmatpush1.msra.mxu0 %v607
        %640 = vmatprep.subr.mxu0 0.0
        %641 = vmatpush1.msra.mxu0 %v608
        %642 = vmatprep.subr.mxu0 0.0
        %643 = vmatpush1.msra.mxu0 %v609
        %644 = vmatprep.subr.mxu0 0.0
        %645 = vmatpush1.msra.mxu0 %v610
        %646 = vmatprep.subr.mxu0 0.0
        %647 = vmatpush1.msra.mxu0 %v611
        %648 = vmatprep.subr.mxu0 0.0
        %649 = vmatpush1.msra.mxu0 %v612
        %650 = vmatprep.subr.mxu0 0.0
        %651 = vmatpush1.msra.mxu0 %v613
        %652 = vmatprep.subr.mxu0 0.0
        %653 = vmatpush1.msra.mxu0 %v614
        %654 = vmatprep.subr.mxu0 0.0
        %655 = vmatpush1.msra.mxu0 0.0
        %656 = vmatprep.subr.mxu0 0.0
        %657 = vmatpush1.msra.mxu0 0.0
        %658 = vmatprep.subr.mxu0 0.0
        %659 = vmatpush1.msra.mxu0 0.0
        %660 = vmatprep.subr.mxu0 0.0
        %661 = vmatpush1.msra.mxu0 0.0
        %662 = vmatprep.subr.mxu0 0.0
        %663 = vmatpush1.msra.mxu0 0.0
        %664 = vmatprep.subr.mxu0 0.0
        %665 = vmatpush1.msra.mxu0 0.0
        %666 = vmatprep.subr.mxu0 0.0
        %667 = vmatpush1.msra.mxu0 0.0
        %668 = vmatprep.subr.mxu0 0.0
        %669 = vmatpush1.msra.mxu0 0.0
        %670 = vmatprep.subr.mxu0 0.0
        %671 = vmatpush1.msra.mxu0 0.0
        %672 = vmatprep.subr.mxu0 0.0
        %673 = vmatpush1.msra.mxu0 0.0
        %674 = vmatprep.subr.mxu0 0.0
        %675 = vmatpush1.msra.mxu0 0.0
        %676 = vmatprep.subr.mxu0 0.0
        %677 = vmatpush1.msra.mxu0 0.0
        %678 = vmatprep.subr.mxu0 0.0
        %679 = vmatpush1.msra.mxu0 0.0
        %680 = vmatprep.subr.mxu0 0.0
        %681 = vmatpush1.msra.mxu0 0.0
        %682 = vmatprep.subr.mxu0 0.0
        %683 = vmatpush1.msra.mxu0 0.0
        %684 = vmatprep.subr.mxu0 0.0
        %685 = vmatpush1.msra.mxu0 0.0
        %686 = vmatprep.mubr.f32.mxu0 0.0
        %687 = vmatmul.mubr.f32.gmra.mrb[0].mxu0 %v597
        %v688 = vpop.f32.mrb[0].mxu0
        %v689 = vadd.f32 %v620, %v688
        %v690 = vpop.f32.mrb[0].mxu0
        %691 = vmatprep.mubr.f32.mxu0 0.0
        %692 = vmatmul.mubr.f32.gmra.mrb[0].mxu0 %v598
        %v693 = vpop.f32.mrb[0].mxu0
        %v694 = vadd.f32 %v620, %v693
        %v695 = vpop.f32.mrb[0].mxu0
        %696 = vdwg.mxu0
        %vm697 = vcmp.ge.f32.partialorder %v689, 0.0
        %vm698 = vcmp.ge.f32.partialorder %v694, 0.0
        %v699 = vmul.f32 %v689, 0.2
        %v700 = vmul.f32 %v694, 0.2
        %v701 = vsel %vm697, %v689, %v699
        %v702 = vsel %vm698, %v694, %v700
        %703 = vst.msk [vmem:[#allocation4] sm:$0xff] %vm541, 0.0
        %704 = vst.msk [vmem:[#allocation4 + $0x8] sm:$0xff] %vm541, 0.0
        %705 = vst.msk [vmem:[#allocation4 + $0x10] sm:$0x3] %vm546, 0.0
        %706 = vst.msk [vmem:[#allocation4 + $0x1] sm:$0xff] %vm541, %v701
        %707 = vst.msk [vmem:[#allocation4 + $0x9] sm:$0xff] %vm541, %v702
        %v708 = vld [vmem:[#allocation4] ss:$2 sm:$0xff]
        %s709 = scalar_lea.vmem [#allocation4], 1
        %v710 = vld [vmem:[%s709] ss:$2 sm:$0xff]
        %s711 = scalar_lea.vmem [#allocation4], 2
        %v712 = vld [vmem:[%s711] ss:$2 sm:$0xff]
        %s713 = scalar_lea.vmem [#allocation4], 3
        %v714 = vld [vmem:[%s713] ss:$2 sm:$0xff]
        %716 = vrot.lane.b32.xlu0 %v710, 32
        %v717 = vpop.permute.xlu0 %716
        %720 = vrot.lane.b32.xlu0 %v712, 64
        %v721 = vpop.permute.xlu0 %720
        %724 = vrot.lane.b32.xlu0 %v714, 96
        %v725 = vpop.permute.xlu0 %724
        %v727 = vsel %vm541, %v708, %v717
        %v728 = vsel %vm593, %v727, %v721
        %v729 = vsel %vm596, %v728, %v725
        %v730 = vld [vmem:[%s3] sm:$0xff]
        %v731 = vld [vmem:[%s3 + $0x8] sm:$0xff]
        %v732 = vld [vmem:[%s3 + $0x10] sm:$0xff]
        %v733 = vld [vmem:[%s3 + $0x18] sm:$0xff]
        %v734 = vld [vmem:[%s3 + $0x20] sm:$0xff]
        %v735 = vld [vmem:[%s3 + $0x28] sm:$0xff]
        %v736 = vld [vmem:[%s3 + $0x30] sm:$0xff]
        %v737 = vld [vmem:[%s3 + $0x38] sm:$0xff]
        %v738 = vld [vmem:[%s3 + $0x40] sm:$0xff]
        %v739 = vld [vmem:[%s3 + $0x48] sm:$0xff]
        %v740 = vld [vmem:[%s3 + $0x50] sm:$0xff]
        %v741 = vld [vmem:[%s3 + $0x58] sm:$0xff]
        %v742 = vld [vmem:[%s3 + $0x60] sm:$0xff]
        %v743 = vld [vmem:[%s3 + $0x68] sm:$0xff]
        %v744 = vld [vmem:[%s3 + $0x70] sm:$0xff]
        %v745 = vld [vmem:[%s3 + $0x78] sm:$0xff]
        %v746 = vld [vmem:[%s7] sm:$0x1]
        %v748 = vlaneseq
        %v749 = vshrl.u32 %v748, 7
        %v750 = vsub.s32 0, %v749
        %v751 = vrot.slane %v746, %v750
        %753 = vmatprep.subr.mxu0 0.0
        %754 = vmatpush1.msra.mxu0 %v730
        %755 = vmatprep.subr.mxu0 0.0
        %756 = vmatpush1.msra.mxu0 %v731
        %757 = vmatprep.subr.mxu0 0.0
        %758 = vmatpush1.msra.mxu0 %v732
        %759 = vmatprep.subr.mxu0 0.0
        %760 = vmatpush1.msra.mxu0 %v733
        %761 = vmatprep.subr.mxu0 0.0
        %762 = vmatpush1.msra.mxu0 %v734
        %763 = vmatprep.subr.mxu0 0.0
        %764 = vmatpush1.msra.mxu0 %v735
        %765 = vmatprep.subr.mxu0 0.0
        %766 = vmatpush1.msra.mxu0 %v736
        %767 = vmatprep.subr.mxu0 0.0
        %768 = vmatpush1.msra.mxu0 %v737
        %769 = vmatprep.subr.mxu0 0.0
        %770 = vmatpush1.msra.mxu0 %v738
        %771 = vmatprep.subr.mxu0 0.0
        %772 = vmatpush1.msra.mxu0 %v739
        %773 = vmatprep.subr.mxu0 0.0
        %774 = vmatpush1.msra.mxu0 %v740
        %775 = vmatprep.subr.mxu0 0.0
        %776 = vmatpush1.msra.mxu0 %v741
        %777 = vmatprep.subr.mxu0 0.0
        %778 = vmatpush1.msra.mxu0 %v742
        %779 = vmatprep.subr.mxu0 0.0
        %780 = vmatpush1.msra.mxu0 %v743
        %781 = vmatprep.subr.mxu0 0.0
        %782 = vmatpush1.msra.mxu0 %v744
        %783 = vmatprep.subr.mxu0 0.0
        %784 = vmatpush1.msra.mxu0 %v745
        %785 = vmatprep.subr.mxu0 0.0
        %786 = vmatpush1.msra.mxu0 0.0
        %787 = vmatprep.subr.mxu0 0.0
        %788 = vmatpush1.msra.mxu0 0.0
        %789 = vmatprep.subr.mxu0 0.0
        %790 = vmatpush1.msra.mxu0 0.0
        %791 = vmatprep.subr.mxu0 0.0
        %792 = vmatpush1.msra.mxu0 0.0
        %793 = vmatprep.subr.mxu0 0.0
        %794 = vmatpush1.msra.mxu0 0.0
        %795 = vmatprep.subr.mxu0 0.0
        %796 = vmatpush1.msra.mxu0 0.0
        %797 = vmatprep.subr.mxu0 0.0
        %798 = vmatpush1.msra.mxu0 0.0
        %799 = vmatprep.subr.mxu0 0.0
        %800 = vmatpush1.msra.mxu0 0.0
        %801 = vmatprep.subr.mxu0 0.0
        %802 = vmatpush1.msra.mxu0 0.0
        %803 = vmatprep.subr.mxu0 0.0
        %804 = vmatpush1.msra.mxu0 0.0
        %805 = vmatprep.subr.mxu0 0.0
        %806 = vmatpush1.msra.mxu0 0.0
        %807 = vmatprep.subr.mxu0 0.0
        %808 = vmatpush1.msra.mxu0 0.0
        %809 = vmatprep.subr.mxu0 0.0
        %810 = vmatpush1.msra.mxu0 0.0
        %811 = vmatprep.subr.mxu0 0.0
        %812 = vmatpush1.msra.mxu0 0.0
        %813 = vmatprep.subr.mxu0 0.0
        %814 = vmatpush1.msra.mxu0 0.0
        %815 = vmatprep.subr.mxu0 0.0
        %816 = vmatpush1.msra.mxu0 0.0
        %817 = vmatprep.mubr.f32.mxu0 0.0
        %818 = vmatmul.mubr.f32.gmra.mrb[0].mxu0 %v729
        %v819 = vpop.f32.mrb[0].mxu0
        %v820 = vadd.f32 %v751, %v819
        %v821 = vpop.f32.mrb[0].mxu0
        %822 = vdwg.mxu0
        %vm823 = vcmp.ge.f32.partialorder %v820, 0.0
        %v824 = vmul.f32 %v820, 0.2
        %v825 = vsel %vm823, %v820, %v824
        %826 = vst.msk [vmem:[#allocation5] sm:$0xff] %vm541, 0.0
        %827 = vst.msk [vmem:[#allocation5 + $0x8] sm:$0x3] %vm546, 0.0
        %828 = vst.msk [vmem:[#allocation5 + $0x1] sm:$0xff] %vm541, %v825
        %v829 = vld [vmem:[#allocation5] sm:$0xff]
        %v830 = vld [vmem:[#allocation5 + $0x1] sm:$0xff]
        %v831 = vld [vmem:[#allocation5 + $0x2] sm:$0xff]
        %833 = vrot.lane.b32.xlu0 %v830, 32
        %v834 = vpop.permute.xlu0 %833
        %837 = vrot.lane.b32.xlu0 %v831, 64
        %v838 = vpop.permute.xlu0 %837
        %v840 = vsel %vm541, %v829, %v834
        %v841 = vsel %vm593, %v840, %v838
        %v842 = vld [vmem:[%s4] sm:$0xff]
        %v843 = vld [vmem:[%s4 + $0x8] sm:$0xff]
        %v844 = vld [vmem:[%s4 + $0x10] sm:$0xff]
        %v845 = vld [vmem:[%s4 + $0x18] sm:$0xff]
        %v846 = vld [vmem:[%s4 + $0x20] sm:$0xff]
        %v847 = vld [vmem:[%s4 + $0x28] sm:$0xff]
        %v848 = vld [vmem:[%s4 + $0x30] sm:$0xff]
        %v849 = vld [vmem:[%s4 + $0x38] sm:$0xff]
        %v850 = vld [vmem:[%s4 + $0x40] sm:$0xff]
        %v851 = vld [vmem:[%s4 + $0x48] sm:$0xff]
        %v852 = vld [vmem:[%s4 + $0x50] sm:$0xff]
        %v853 = vld [vmem:[%s4 + $0x58] sm:$0xff]
        %v854 = vld [vmem:[%s8] sm:$0x1]
        %v856 = vlaneseq
        %v857 = vshrl.u32 %v856, 7
        %v858 = vsub.s32 0, %v857
        %v859 = vrot.slane %v854, %v858
        %v862 = vsel %vm596, %v841, 0
        %864 = vmatprep.subr.mxu0 0.0
        %865 = vmatpush1.msra.mxu0 %v842
        %866 = vmatprep.subr.mxu0 0.0
        %867 = vmatpush1.msra.mxu0 %v843
        %868 = vmatprep.subr.mxu0 0.0
        %869 = vmatpush1.msra.mxu0 %v844
        %870 = vmatprep.subr.mxu0 0.0
        %871 = vmatpush1.msra.mxu0 %v845
        %872 = vmatprep.subr.mxu0 0.0
        %873 = vmatpush1.msra.mxu0 %v846
        %874 = vmatprep.subr.mxu0 0.0
        %875 = vmatpush1.msra.mxu0 %v847
        %876 = vmatprep.subr.mxu0 0.0
        %877 = vmatpush1.msra.mxu0 %v848
        %878 = vmatprep.subr.mxu0 0.0
        %879 = vmatpush1.msra.mxu0 %v849
        %880 = vmatprep.subr.mxu0 0.0
        %881 = vmatpush1.msra.mxu0 %v850
        %882 = vmatprep.subr.mxu0 0.0
        %883 = vmatpush1.msra.mxu0 %v851
        %884 = vmatprep.subr.mxu0 0.0
        %885 = vmatpush1.msra.mxu0 %v852
        %886 = vmatprep.subr.mxu0 0.0
        %887 = vmatpush1.msra.mxu0 %v853
        %888 = vmatprep.subr.mxu0 0.0
        %889 = vmatpush1.msra.mxu0 0.0
        %890 = vmatprep.subr.mxu0 0.0
        %891 = vmatpush1.msra.mxu0 0.0
        %892 = vmatprep.subr.mxu0 0.0
        %893 = vmatpush1.msra.mxu0 0.0
        %894 = vmatprep.subr.mxu0 0.0
        %895 = vmatpush1.msra.mxu0 0.0
        %896 = vmatprep.subr.mxu0 0.0
        %897 = vmatpush1.msra.mxu0 0.0
        %898 = vmatprep.subr.mxu0 0.0
        %899 = vmatpush1.msra.mxu0 0.0
        %900 = vmatprep.subr.mxu0 0.0
        %901 = vmatpush1.msra.mxu0 0.0
        %902 = vmatprep.subr.mxu0 0.0
        %903 = vmatpush1.msra.mxu0 0.0
        %904 = vmatprep.subr.mxu0 0.0
        %905 = vmatpush1.msra.mxu0 0.0
        %906 = vmatprep.subr.mxu0 0.0
        %907 = vmatpush1.msra.mxu0 0.0
        %908 = vmatprep.subr.mxu0 0.0
        %909 = vmatpush1.msra.mxu0 0.0
        %910 = vmatprep.subr.mxu0 0.0
        %911 = vmatpush1.msra.mxu0 0.0
        %912 = vmatprep.subr.mxu0 0.0
        %913 = vmatpush1.msra.mxu0 0.0
        %914 = vmatprep.subr.mxu0 0.0
        %915 = vmatpush1.msra.mxu0 0.0
        %916 = vmatprep.subr.mxu0 0.0
        %917 = vmatpush1.msra.mxu0 0.0
        %918 = vmatprep.subr.mxu0 0.0
        %919 = vmatpush1.msra.mxu0 0.0
        %920 = vmatprep.subr.mxu0 0.0
        %921 = vmatpush1.msra.mxu0 0.0
        %922 = vmatprep.subr.mxu0 0.0
        %923 = vmatpush1.msra.mxu0 0.0
        %924 = vmatprep.subr.mxu0 0.0
        %925 = vmatpush1.msra.mxu0 0.0
        %926 = vmatprep.subr.mxu0 0.0
        %927 = vmatpush1.msra.mxu0 0.0
        %928 = vmatprep.mubr.f32.mxu0 0.0
        %929 = vmatmul.mubr.f32.gmra.mrb[0].mxu0 %v862
        %v930 = vpop.f32.mrb[0].mxu0
        %v931 = vadd.f32 %v859, %v930
        %v932 = vpop.f32.mrb[0].mxu0
        %933 = vdwg.mxu0
        %934 = vst.msk [vmem:[%s325] sm:$0xff] %vm593, %v931
        %s935 = sand.u32 %s225, 1
        %s936 = scalar_lea.sflag [#allocation7], %s935
        %s937 = sand.u32 %s225, 1
        %s938 = smul.addr %s937, 8
        %s939 = scalar_lea.vmem [#allocation6], %s938
        // Predicated region
        $region57: #{encoder_forward.1} parent=55 // pred_check
          %p940 = pneg %p235
        $region58: #{encoder_forward.1} parent=55 // pred_check_branch
          %942 = sbr.rel (%p940) target = $region60
        $region59: #{encoder_forward.1} parent=55 // pred_region
          %s944 = ssub.s32 128, 128
          %945 = vsyncadd %s936, %s944
          %s946 = smul.addr %s23, 128
          %s947 = scalar_lea.hbm %s9, %s946
          %s949 = sshll.u32 %s939, 4
          %s950 = int_to_ptr.vmem [resolvable:$true] %s949
          %952 = dma.vmem_to_hbm [thread:$0]  %s950, 128, %s947, %s936
        $region60: #{encoder_forward.1} parent=55 // pred_fallthru
          _
      $region56: #{encoder_forward.1} parent=5 // pred_fallthru
        _
      %p953 = scmp.le.s32.totalorder 2, %s18
      // Predicated region
      $region61: #{encoder_forward.1} parent=5 // pred_check
        %p954 = pneg %p953
      $region62: #{encoder_forward.1} parent=5 // pred_check_branch
        %956 = sbr.rel (%p954) target = $region64
      $region63: #{encoder_forward.1} parent=5 // pred_region
        %s957 = ssub.s32 %s18, 2
        // Predicated region
        $region65: #{encoder_forward.1} parent=63 // pred_check
          %p958 = pneg %p241
        $region66: #{encoder_forward.1} parent=63 // pred_check_branch
          %960 = sbr.rel (%p958) target = $region68
        $region67: #{encoder_forward.1} parent=63 // pred_region
          %s961 = sand.u32 %s226, 1
          %s962 = scalar_lea.sflag [#allocation7], %s961
          %s963 = sand.u32 %s226, 1
          %s964 = smul.addr %s963, 8
          %s965 = scalar_lea.vmem [#allocation6], %s964
          %966 = dma.done %s962, 128
        $region68: #{encoder_forward.1} parent=63 // pred_fallthru
          _
      $region64: #{encoder_forward.1} parent=5 // pred_fallthru
        _
    $region6: #{encoder_forward.1} parent=1 // loop_footer
      %s22 = sadd.s32 1, %s18
    $region7: #{encoder_forward.1} parent=1 // loop_footer_branch
      %17 = sbr.rel target = $region3
    $region8: #{encoder_forward.1} parent=1 // loop_exit
      _
    %967 = vsyncpa [#allocation7], 1
    %s968 = scalar_lea.sflag [#allocation7], 1
    %969 = vsyncpa %s968, 1

</llo_original>
